<compile_context>
chip_gen: v7x
topology: tpu7x:2x2x1
jax: 0.10.0
libtpu: 0.0.40
codegen_flags: <defaults>
</compile_context>

<pallas_src>
import functools

import jax
import jax.numpy as jnp
from jax.experimental import pallas as pl
from jax.experimental.pallas import tpu as pltpu


_LANE = 128
_MiB = 1024 * 1024


def _sublane_quantum(dtype) -> int:
    """Minimum second-minor block multiple for this dtype (8 f32 / 16 bf16 / 32 i8)."""
    return max(8, 32 // jnp.dtype(dtype).itemsize)


def _round_up(x: int, m: int) -> int:
    return ((x + m - 1) // m) * m


def _vmem_capacity_bytes() -> int:
    """Per-core VMEM capacity (trace-time query; conservative fallback)."""
    try:
        info = pltpu.get_tpu_info()
        cap = int(getattr(info, "vmem_capacity_bytes", 0) or 0)
        if cap > 0:
            return cap
    except Exception:
        pass
    return 64 * _MiB  # conservative (v7x-sized) default


def _target_tile_bytes() -> int:
    cap = _vmem_capacity_bytes()
    if cap <= 64 * _MiB:
        # v7x: ~3.2 TB/s HBM per TC -> go big to amortize per-step overhead,
        # while 2x tile + outputs stays well under the 64 MiB physical VMEM.
        return 12 * _MiB
    # v5e / v6e (128 MiB VMEM): 8 MiB tiles -> 16 MiB double-buffered.
    return 8 * _MiB


def _choose_rows(bc: int, hw: int, dtype) -> int:
    """Rows per input tile.

    ~target bytes of *lane-padded* input per tile, a multiple of the sublane
    quantum, capped so there are >= 2 grid steps when possible (v7x megacore),
    and snapped to a divisor of bc near the target when one exists (avoids a
    padded partial last tile).
    """
    itemsize = jnp.dtype(dtype).itemsize
    q = _sublane_quantum(dtype)
    hw_padded = _round_up(hw, _LANE)          # real per-row VMEM footprint
    row_bytes = hw_padded * itemsize

    rows = _target_tile_bytes() // max(1, row_bytes)
    rows = max(q, (rows // q) * q)

    # Keep at least 2 grid steps so dimension_semantics=("parallel",) has work
    # for both TensorCores on v7x (harmless single extra step elsewhere).
    if bc >= 2 * q:
        half = max(q, (pl.cdiv(bc, 2) // q) * q)
        rows = min(rows, half)

    if rows >= bc:
        return bc                             # full-extent block: always legal

    # Prefer the largest multiple-of-q divisor of bc that is <= rows: then no
    # out-of-bounds-padded partial last tile is streamed / computed / sliced.
    r = rows
    while r >= q:
        if bc % r == 0:
            return r
        r -= q
    return rows


def _avg_pool_kernel(x_ref, o_ref, *, inv_hw):
    # x_ref: (ROWS, H*W) tile in VMEM.  Reduce along lanes in f32, then write
    # the per-row means lane-dense as a (1, ROWS) row (unmasked vector stores).
    col = jnp.sum(x_ref[...].astype(jnp.float32), axis=-1, keepdims=True)  # (ROWS, 1)
    o_ref[...] = (jnp.transpose(col) * inv_hw).astype(o_ref.dtype)         # (1, ROWS)


def global_forward(x, *, tile_rows=None):
    """Pallas equivalent of Global.forward for NCHW input x -> (B, C)."""
    b, c, h, w = x.shape
    bc, hw = b * c, h * w
    x2d = x.reshape(bc, hw)                   # reduction axis on lanes

    itemsize = jnp.dtype(x.dtype).itemsize
    rows = tile_rows if tile_rows is not None else _choose_rows(bc, hw, x.dtype)
    num_tiles = pl.cdiv(bc, rows)
    hw_padded = _round_up(hw, _LANE)

    # Explicit scoped-VMEM budget: double-buffered (lane-padded) input tile +
    # double-buffered output row + headroom.  Raised above v5e's 16 MiB scoped
    # default, capped under v7x's 64 MiB physical VMEM.
    need = (2 * rows * hw_padded * itemsize
            + 2 * _round_up(rows, _LANE) * itemsize
            + 2 * _MiB)
    vmem_limit = int(min(48 * _MiB, max(32 * _MiB, need)))

    cost = pl.CostEstimate(
        flops=bc * hw,                        # one add per element (mem-bound)
        transcendentals=0,
        bytes_accessed=bc * hw * itemsize + bc * itemsize,
    )

    pooled = pl.pallas_call(
        functools.partial(_avg_pool_kernel, inv_hw=1.0 / float(hw)),
        out_shape=jax.ShapeDtypeStruct((num_tiles, rows), x.dtype),
        grid=(num_tiles,),
        in_specs=[pl.BlockSpec((rows, hw), lambda i: (i, 0))],
        out_specs=pl.BlockSpec((1, rows), lambda i: (i, 0)),
        compiler_params=pltpu.CompilerParams(
            dimension_semantics=("parallel",),
            vmem_limit_bytes=vmem_limit,
        ),
        cost_estimate=cost,
    )(x2d)

    # Entries past B*C (only present if an explicit tile_rows does not divide
    # B*C) are padding and sliced off.
    return pooled.reshape(num_tiles * rows)[:bc].reshape(b, c)


if __name__ == "__main__":
    k1, k2 = jax.random.split(jax.random.PRNGKey(0))

    # Small shape consistent with the module: batch=2, channels=4, spatial=16x16.
    B, C, H, W = 2, 4, 16, 16
    x = jax.random.normal(k1, (B, C, H, W), dtype=jnp.float32)
    out = jax.block_until_ready(global_forward(x))
    ref = jnp.mean(x, axis=(2, 3))
    assert out.shape == (B, C), out.shape
    assert jnp.allclose(out, ref, atol=1e-6, rtol=1e-6), "mismatch vs reference"

    # Multi-tile grid path with the automatic row choice (divisor of B*C, no
    # partial tile): B*C = 24 rows -> rows=8 -> 3 grid steps.
    B2, C2, H2, W2 = 2, 12, 8, 8
    x2 = jax.random.normal(k2, (B2, C2, H2, W2), dtype=jnp.float32)
    out2 = jax.block_until_ready(global_forward(x2))
    ref2 = jnp.mean(x2, axis=(2, 3))
    assert out2.shape == (B2, C2), out2.shape
    assert jnp.allclose(out2, ref2, atol=1e-6, rtol=1e-6), "mismatch vs reference (tiled)"

    # Explicit tile_rows exercising a partial last tile (16-row tiles over 24
    # rows): padded results are sliced off, output still exact.
    out3 = jax.block_until_ready(global_forward(x2, tile_rows=16))
    assert jnp.allclose(out3, ref2, atol=1e-6, rtol=1e-6), "mismatch vs reference (partial tile)"

    print("KERNEL_OK")
</pallas_src>

<mosaic_0001>
module attributes {stable_mosaic.version = 11 : i64} {
  func.func @_avg_pool_kernel(%arg0: i32, %arg1: memref<8x256xf32, #tpu.memory_space<vmem>>, %arg2: memref<1x8xf32, #tpu.memory_space<vmem>>) attributes {dimension_semantics = [#tpu.dimension_semantics<parallel>], iteration_bounds = array<i64: 1>, scalar_prefetch = 0 : i64, scratch_operands = 0 : i64, tpu.core_type = #tpu.core_type<tc>, window_params = [{transform_indices = @transform_0, window_bounds = array<i64: 8, 256>}, {transform_indices = @transform_1, window_bounds = array<i64: 1, 8>}]} {
    %c0 = arith.constant 0 : index
    %c0_0 = arith.constant 0 : index
    %0 = vector.load %arg1[%c0, %c0_0] : memref<8x256xf32, #tpu.memory_space<vmem>>, vector<8x256xf32>
    %cst = arith.constant dense<0.000000e+00> : vector<8xf32>
    %1 = vector.multi_reduction <add>, %0, %cst [1] : vector<8x256xf32> to vector<8xf32>
    %2 = vector.shape_cast %1 : vector<8xf32> to vector<8x1xf32>
    %3 = tpu.transpose %2, [1, 0] : vector<8x1xf32> -> vector<1x8xf32>
    %cst_1 = arith.constant 3.906250e-03 : f32
    %4 = vector.broadcast %cst_1 : f32 to vector<1x8xf32>
    %5 = arith.mulf %3, %4 : vector<1x8xf32>
    %c0_2 = arith.constant 0 : index
    %c0_3 = arith.constant 0 : index
    %6 = vector.load %arg2[%c0_2, %c0_3] : memref<1x8xf32, #tpu.memory_space<vmem>>, vector<1x8xf32>
    tpu.vector_store %arg2[%c0_2, %c0_3], %5 {strides = array<i32>} : memref<1x8xf32, #tpu.memory_space<vmem>>, vector<1x8xf32>,
    return
  }
  func.func @transform_0(%arg0: i32) -> (i32, i32) {
    %c0_i32 = arith.constant 0 : i32
    %c0_i32_0 = arith.constant 0 : i32
    return %arg0, %c0_i32 : i32, i32
  }
  func.func @transform_1(%arg0: i32) -> (i32, i32) {
    %c0_i32 = arith.constant 0 : i32
    %c0_i32_0 = arith.constant 0 : i32
    return %arg0, %c0_i32 : i32, i32
  }
}

</mosaic_0001>

<llo_original>
// kernel: tpu_custom_call.1
$region0: #{tpu_custom_call.1}
  #allocation0 [shape = 'u32[]', space=smem, size = 0x4, offset = 0x4, fixed_abs, tag = 'smem constant byte address 0x4 - core index']
  #allocation1 [shape = 'u32[144,128]{1,0:T(1,128)}', space=vmem, size = 0x12000, scoped, tag = 'internal scratch']
  %s0 = inlined_call_operand.hbm [shape: f32[8,256], index: 0, kind: input, shape index: {}]
  %s1 = inlined_call_operand.hbm [shape: f32[1,8], index: 1, kind: output, shape index: {}]
  %s2 = sld [smem:[#allocation0]]
  $region18: #{tpu_custom_call.1} parent=0
    _
  %s4 = ssub.s32 1, %s2
  %s5 = scalar_select 0, %s4, %s2
  $region1: #{tpu_custom_call.1} parent=0
    #allocation2 [shape = 'u8[8192]{0}', space=vmem, size = 0x2000, scoped, tag = 'input window, operand 0, single buffered']
    #allocation3 [shape = 's32[1]{0}', space=sflag, size = 0x4, scoped, tag = 'scoped memory for tpu_custom_call.1']
    #allocation4 [shape = 's32[1]{0}', space=sflag, size = 0x4, scoped, tag = 'scoped memory for tpu_custom_call.1']
    #allocation5 [shape = 'u8[512]{0}', space=vmem, size = 0x400, scoped, tag = 'output window, operand 0, single buffered']
    %6 = vsyncpa [#allocation3], 0
    %7 = vsyncpa [#allocation4], 0
    // Predicated region
    $region2: #{tpu_custom_call.1} parent=1 // pred_check
      _
    $region3: #{tpu_custom_call.1} parent=1 // pred_check_branch
      %9 = sbr.rel (0) target = $region5
    $region4: #{tpu_custom_call.1} parent=1 // pred_region
      %s11 = ssub.s32 256, 256
      %12 = vsyncadd [#allocation3], %s11
      %s14 = sshll.u32 [#allocation2], 4
      %s15 = int_to_ptr.vmem [resolvable:$true] %s14
      %17 = dma.hbm_to_vmem [thread:$0]  %s0, 256, %s15, [#allocation3]
    $region5: #{tpu_custom_call.1} parent=1 // pred_fallthru
      _
    // Predicated region
    $region6: #{tpu_custom_call.1} parent=1 // pred_check
      _
    $region7: #{tpu_custom_call.1} parent=1 // pred_check_branch
      %19 = sbr.rel (0) target = $region9
    $region8: #{tpu_custom_call.1} parent=1 // pred_region
      %20 = dma.done [#allocation3], 256
    $region9: #{tpu_custom_call.1} parent=1 // pred_fallthru
      _
    %v21 = vld [vmem:[#allocation2] sm:$0xff]
    %v22 = vld [vmem:[#allocation2 + $0x8] sm:$0xff]
    %v23 = vadd.f32 %v21, %v22
    %24 = vadd.xlane.f32.xlu0 %v23
    %v25 = vpop.xlane.xlu0 %24
    %26 = vxpose.xlu0.b32.start [1/16] %v25, 128
    %27 = vxpose.xlu0.b32.cont [2/16] 0.0, 128
    %28 = vxpose.xlu0.b32.cont [3/16] 0.0, 128
    %29 = vxpose.xlu0.b32.cont [4/16] 0.0, 128
    %30 = vxpose.xlu0.b32.cont [5/16] 0.0, 128
    %31 = vxpose.xlu0.b32.cont [6/16] 0.0, 128
    %32 = vxpose.xlu0.b32.cont [7/16] 0.0, 128
    %33 = vxpose.xlu0.b32.cont [8/16] 0.0, 128
    %34 = vxpose.xlu0.b32.cont [9/16] 0.0, 128
    %35 = vxpose.xlu0.b32.cont [10/16] 0.0, 128
    %36 = vxpose.xlu0.b32.cont [11/16] 0.0, 128
    %37 = vxpose.xlu0.b32.cont [12/16] 0.0, 128
    %38 = vxpose.xlu0.b32.cont [13/16] 0.0, 128
    %39 = vxpose.xlu0.b32.cont [14/16] 0.0, 128
    %40 = vxpose.xlu0.b32.cont [15/16] 0.0, 128
    %41 = vxpose.xlu0.b32.end [16/16] 0.0, 128
    %v42 = vpop.trf.xlu0
    %v43 = vpop.trf.xlu0
    %v44 = vpop.trf.xlu0
    %v45 = vpop.trf.xlu0
    %v46 = vpop.trf.xlu0
    %v47 = vpop.trf.xlu0
    %v48 = vpop.trf.xlu0
    %v49 = vpop.trf.xlu0
    %v50 = vpop.trf.xlu0
    %v51 = vpop.trf.xlu0
    %v52 = vpop.trf.xlu0
    %v53 = vpop.trf.xlu0
    %v54 = vpop.trf.xlu0
    %v55 = vpop.trf.xlu0
    %v56 = vpop.trf.xlu0
    %v57 = vpop.trf.xlu0
    %v58 = vmul.f32 %v42, 0.00390625
    %vm59 = vcmask 57344
    %60 = vst.msk [vmem:[#allocation5] sm:$0x1] %vm59, %v58
    // Predicated region
    $region10: #{tpu_custom_call.1} parent=1 // pred_check
      _
    $region11: #{tpu_custom_call.1} parent=1 // pred_check_branch
      %62 = sbr.rel (0) target = $region13
    $region12: #{tpu_custom_call.1} parent=1 // pred_region
      %s64 = ssub.s32 16, 16
      %65 = vsyncadd [#allocation4], %s64
      %s67 = sshll.u32 [#allocation5], 4
      %s68 = int_to_ptr.vmem [resolvable:$true] %s67
      %70 = dma.vmem_to_hbm [thread:$0]  %s68, 16, %s1, [#allocation4]
    $region13: #{tpu_custom_call.1} parent=1 // pred_fallthru
      _
    // Predicated region
    $region14: #{tpu_custom_call.1} parent=1 // pred_check
      _
    $region15: #{tpu_custom_call.1} parent=1 // pred_check_branch
      %72 = sbr.rel (0) target = $region17
    $region16: #{tpu_custom_call.1} parent=1 // pred_region
      %73 = dma.done [#allocation4], 16
    $region17: #{tpu_custom_call.1} parent=1 // pred_fallthru
      _
    %74 = vsyncpa [#allocation3], 1
    %75 = vsyncpa [#allocation4], 1

</llo_original>
